<compile_context>
chip_gen: v7x
topology: tpu7x:2x2x1
jax: 0.10.0
libtpu: 0.0.40
codegen_flags: <defaults>
</compile_context>

<pallas_src>
import functools

import jax
import jax.numpy as jnp
from jax.experimental import pallas as pl
from jax.experimental.pallas import tpu as pltpu


def _round_up(n, m):
    return ((n + m - 1) // m) * m


def _poly_kernel(x_ref, w_ref, b_ref, o_ref, *, degree):
    """One batch tile (rows may be lane-packed: P batch rows per vreg row).

    Per-degree accumulation -- no lane-axis concatenate, no feats temp:
        acc = sum_d (x ** (d+1)) @ W_d      (W_d block-diagonal when packed)
    """
    x = x_ref[...]                                            # (tile_r, PF) f32
    acc = jnp.dot(x, w_ref[0], preferred_element_type=jnp.float32)
    xp = x
    for d in range(1, degree):
        xp = xp * x                                           # VPU power chain
        acc = acc + jnp.dot(xp, w_ref[d],
                            preferred_element_type=jnp.float32)
    o_ref[...] = (acc + b_ref[...]).astype(o_ref.dtype)


def polynomial_regression(x, w, b, degree, *, tile_b=4096):
    """x: (B, F) f32; w: (O, F*degree) exactly as torch.nn.Linear stores it
    (column block d multiplies x**(d+1)); b: (O,).  Returns (B, O)."""
    B, F = x.shape
    O = w.shape[0]
    K = F * degree
    assert w.shape == (O, K), (w.shape, (O, K))

    # ---- lane packing: put P batch rows into one 128-lane vreg row --------
    if F < 128 and 128 % F == 0:
        P = 128 // F
    else:
        P = 1
        # TODO(synk): when F does not divide 128 and O == 1 the output stays
        # 1 lane wide (masked stores); the shipped config (F=16, O=1) takes
        # the packed, lane-dense path.
    PF, PO = P * F, P * O

    # ---- tiling over packed rows -------------------------------------------
    R = -(-B // P)                                 # packed rows needed (cdiv)
    R8 = _round_up(max(R, 1), 8)
    tile_r = max(8, _round_up(max(tile_b // P, 1), 8))
    if R8 > 8:
        # keep >= 2 grid steps so v7x's two TensorCores both get work
        tile_r = min(tile_r, _round_up(-(-R8 // 2), 8))
    else:
        tile_r = 8

    # ---- honest VMEM accounting (includes (8,128) lane/sublane padding) ----
    def _vmem_bytes(tr):
        lane = lambda n: _round_up(n, 128)
        x_tile = tr * lane(PF) * 4
        o_tile = tr * lane(PO) * 4
        w_res = degree * _round_up(PF, 8) * lane(PO) * 4
        b_res = 8 * 128 * 4
        temps = 2 * tr * lane(PF) * 4 + tr * lane(PO) * 4   # power chain + acc
        return 2 * (x_tile + o_tile) + w_res + b_res + temps

    VMEM_BUDGET = 40 * 1024 * 1024        # stay well under v7x's 64 MiB physical
    while tile_r > 8 and _vmem_bytes(tile_r) > VMEM_BUDGET:
        tile_r = max(8, _round_up(tile_r // 2, 8))
    vmem_limit = int(min(max(_vmem_bytes(tile_r) + (2 << 20), 16 << 20), 48 << 20))

    padded_R = _round_up(R, tile_r)
    padded_B = padded_R * P
    if padded_B != B:
        x = jnp.pad(x, ((0, padded_B - B), (0, 0)))
    x_packed = x.reshape(padded_R, PF)             # row-major, zero-copy

    # ---- one-time weight/bias layout plumbing (never per-tile) -------------
    # Per-degree (F, O) slices expanded to block-diagonal (P*F, P*O) slabs so
    # the packed dot computes every batch row's output in its own lane group.
    eye_p = jnp.eye(P, dtype=w.dtype)
    w_arg = jnp.stack(
        [jnp.einsum('pq,fo->pfqo', eye_p, w[:, d * F:(d + 1) * F].T)
             .reshape(PF, PO)
         for d in range(degree)],
        axis=0)                                    # (degree, PF, PO), resident
    b_arg = jnp.tile(b, P).reshape(1, PO)

    grid = (padded_R // tile_r,)

    cost = pl.CostEstimate(
        flops=2 * padded_B * K * O + padded_B * F * max(degree - 1, 0),
        transcendentals=0,
        bytes_accessed=4 * (padded_B * F + degree * PF * PO + PO + padded_B * O),
    )

    out_packed = pl.pallas_call(
        functools.partial(_poly_kernel, degree=degree),
        out_shape=jax.ShapeDtypeStruct((padded_R, PO), x.dtype),
        grid=grid,
        in_specs=[
            pl.BlockSpec((tile_r, PF), lambda i: (i, 0)),          # x: tiled
            pl.BlockSpec((degree, PF, PO), lambda i: (0, 0, 0)),   # W: resident
            pl.BlockSpec((1, PO), lambda i: (0, 0)),               # b: resident
        ],
        out_specs=pl.BlockSpec((tile_r, PO), lambda i: (i, 0)),
        compiler_params=pltpu.CompilerParams(
            dimension_semantics=("parallel",),
            vmem_limit_bytes=vmem_limit,
        ),
        cost_estimate=cost,
    )(x_packed, w_arg, b_arg)

    out = out_packed.reshape(padded_B, O)          # unpack lanes -> batch rows
    return out[:B] if padded_B != B else out


if __name__ == "__main__":
    def reference(x, w, b, degree):
        feats = jnp.concatenate([x ** n for n in range(1, degree + 1)], axis=1)
        return feats @ w.T + b

    keys = jax.random.split(jax.random.PRNGKey(0), 9)

    # Config 1: shipped module shapes (tabular regression, output_dim = 1)
    #           -> packed path (P = 8), lane-dense 8-wide output.
    B1, F1, O1, D1 = 8, 16, 1, 3
    x1 = jax.random.normal(keys[0], (B1, F1), dtype=jnp.float32)
    w1 = jax.random.normal(keys[1], (O1, F1 * D1), dtype=jnp.float32) * 0.1
    b1 = jax.random.normal(keys[2], (O1,), dtype=jnp.float32) * 0.1
    y1 = jax.block_until_ready(polynomial_regression(x1, w1, b1, D1))
    assert y1.shape == (B1, O1)
    assert jnp.allclose(y1, reference(x1, w1, b1, D1), atol=1e-4, rtol=1e-4), \
        "packed-path (O=1) mismatch vs reference"

    # Config 2: ragged batch, several grid steps on the packed path.
    B2, F2, O2, D2 = 200, 16, 4, 2
    x2 = jax.random.normal(keys[3], (B2, F2), dtype=jnp.float32)
    w2 = jax.random.normal(keys[4], (O2, F2 * D2), dtype=jnp.float32) * 0.1
    b2 = jax.random.normal(keys[5], (O2,), dtype=jnp.float32) * 0.1
    y2 = jax.block_until_ready(polynomial_regression(x2, w2, b2, D2, tile_b=64))
    assert y2.shape == (B2, O2)
    assert jnp.allclose(y2, reference(x2, w2, b2, D2), atol=1e-4, rtol=1e-4), \
        "packed multi-tile mismatch vs reference"

    # Config 3: F = 128 -> unpacked fallback (P = 1), two grid steps.
    B3, F3, O3, D3 = 32, 128, 8, 2
    x3 = jax.random.normal(keys[6], (B3, F3), dtype=jnp.float32)
    w3 = jax.random.normal(keys[7], (O3, F3 * D3), dtype=jnp.float32) * 0.1
    b3 = jax.random.normal(keys[8], (O3,), dtype=jnp.float32) * 0.1
    y3 = jax.block_until_ready(polynomial_regression(x3, w3, b3, D3))
    assert y3.shape == (B3, O3)
    assert jnp.allclose(y3, reference(x3, w3, b3, D3), atol=1e-4, rtol=1e-4), \
        "unpacked-path mismatch vs reference"

    print("KERNEL_OK")
</pallas_src>

<mosaic_0001>
module attributes {stable_mosaic.version = 11 : i64} {
  func.func @_poly_kernel(%arg0: i32, %arg1: memref<8x128xf32, #tpu.memory_space<vmem>>, %arg2: memref<3x128x8xf32, #tpu.memory_space<vmem>>, %arg3: memref<1x8xf32, #tpu.memory_space<vmem>>, %arg4: memref<8x8xf32, #tpu.memory_space<vmem>>) attributes {dimension_semantics = [#tpu.dimension_semantics<parallel>], iteration_bounds = array<i64: 1>, scalar_prefetch = 0 : i64, scratch_operands = 0 : i64, tpu.core_type = #tpu.core_type<tc>, window_params = [{transform_indices = @transform_0, window_bounds = array<i64: 8, 128>}, {pipeline_mode = #tpu.pipeline_mode<synchronous>, transform_indices = @transform_1, window_bounds = array<i64: 3, 128, 8>}, {pipeline_mode = #tpu.pipeline_mode<synchronous>, transform_indices = @transform_2, window_bounds = array<i64: 1, 8>}, {transform_indices = @transform_3, window_bounds = array<i64: 8, 8>}]} {
    %c0 = arith.constant 0 : index
    %c0_0 = arith.constant 0 : index
    %0 = vector.load %arg1[%c0, %c0_0] : memref<8x128xf32, #tpu.memory_space<vmem>>, vector<8x128xf32>
    %c0_1 = arith.constant 0 : index
    %c0_2 = arith.constant 0 : index
    %c0_3 = arith.constant 0 : index
    %1 = vector.load %arg2[%c0_1, %c0_2, %c0_3] : memref<3x128x8xf32, #tpu.memory_space<vmem>>, vector<1x128x8xf32>
    %2 = vector.shape_cast %1 : vector<1x128x8xf32> to vector<128x8xf32>
    %cst = arith.constant dense<0.000000e+00> : vector<8x8xf32>
    %3 = tpu.matmul %0, %2, %cst {dimension_numbers = #tpu.dot_dimension_numbers<[1], [0], [0], [1], [0, 0, 1, 1], [], []>} : vector<8x128xf32>, vector<128x8xf32>, vector<8x8xf32> -> vector<8x8xf32>
    %4 = arith.mulf %0, %0 : vector<8x128xf32>
    %c1 = arith.constant 1 : index
    %c0_4 = arith.constant 0 : index
    %c0_5 = arith.constant 0 : index
    %5 = vector.load %arg2[%c1, %c0_4, %c0_5] : memref<3x128x8xf32, #tpu.memory_space<vmem>>, vector<1x128x8xf32>
    %6 = vector.shape_cast %5 : vector<1x128x8xf32> to vector<128x8xf32>
    %cst_6 = arith.constant dense<0.000000e+00> : vector<8x8xf32>
    %7 = tpu.matmul %4, %6, %cst_6 {dimension_numbers = #tpu.dot_dimension_numbers<[1], [0], [0], [1], [0, 0, 1, 1], [], []>} : vector<8x128xf32>, vector<128x8xf32>, vector<8x8xf32> -> vector<8x8xf32>
    %8 = arith.addf %3, %7 : vector<8x8xf32>
    %9 = arith.mulf %4, %0 : vector<8x128xf32>
    %c2 = arith.constant 2 : index
    %c0_7 = arith.constant 0 : index
    %c0_8 = arith.constant 0 : index
    %10 = vector.load %arg2[%c2, %c0_7, %c0_8] : memref<3x128x8xf32, #tpu.memory_space<vmem>>, vector<1x128x8xf32>
    %11 = vector.shape_cast %10 : vector<1x128x8xf32> to vector<128x8xf32>
    %cst_9 = arith.constant dense<0.000000e+00> : vector<8x8xf32>
    %12 = tpu.matmul %9, %11, %cst_9 {dimension_numbers = #tpu.dot_dimension_numbers<[1], [0], [0], [1], [0, 0, 1, 1], [], []>} : vector<8x128xf32>, vector<128x8xf32>, vector<8x8xf32> -> vector<8x8xf32>
    %13 = arith.addf %8, %12 : vector<8x8xf32>
    %c0_10 = arith.constant 0 : index
    %c0_11 = arith.constant 0 : index
    %14 = vector.load %arg3[%c0_10, %c0_11] : memref<1x8xf32, #tpu.memory_space<vmem>>, vector<1x8xf32>
    %15 = vector.broadcast %14 : vector<1x8xf32> to vector<8x8xf32>
    %16 = arith.addf %13, %15 : vector<8x8xf32>
    %c0_12 = arith.constant 0 : index
    %c0_13 = arith.constant 0 : index
    %17 = vector.load %arg4[%c0_12, %c0_13] : memref<8x8xf32, #tpu.memory_space<vmem>>, vector<8x8xf32>
    tpu.vector_store %arg4[%c0_12, %c0_13], %16 {strides = array<i32>} : memref<8x8xf32, #tpu.memory_space<vmem>>, vector<8x8xf32>,
    return
  }
  func.func @transform_0(%arg0: i32) -> (i32, i32) {
    %c0_i32 = arith.constant 0 : i32
    %c0_i32_0 = arith.constant 0 : i32
    return %arg0, %c0_i32 : i32, i32
  }
  func.func @transform_1(%arg0: i32) -> (i32, i32, i32) {
    %c0_i32 = arith.constant 0 : i32
    %c0_i32_0 = arith.constant 0 : i32
    %c0_i32_1 = arith.constant 0 : i32
    %c0_i32_2 = arith.constant 0 : i32
    return %c0_i32, %c0_i32_0, %c0_i32_1 : i32, i32, i32
  }
  func.func @transform_2(%arg0: i32) -> (i32, i32) {
    %c0_i32 = arith.constant 0 : i32
    %c0_i32_0 = arith.constant 0 : i32
    %c0_i32_1 = arith.constant 0 : i32
    return %c0_i32, %c0_i32_0 : i32, i32
  }
  func.func @transform_3(%arg0: i32) -> (i32, i32) {
    %c0_i32 = arith.constant 0 : i32
    %c0_i32_0 = arith.constant 0 : i32
    return %arg0, %c0_i32 : i32, i32
  }
}

</mosaic_0001>

<llo_original>
// kernel: tpu_custom_call.1
$region0: #{tpu_custom_call.1}
  #allocation0 [shape = 'u32[]', space=smem, size = 0x4, offset = 0x4, fixed_abs, tag = 'smem constant byte address 0x4 - core index']
  #allocation1 [shape = 'u32[144,128]{1,0:T(1,128)}', space=vmem, size = 0x12000, scoped, tag = 'internal scratch']
  %s0 = inlined_call_operand.vmem [shape: f32[8,128], index: 0, kind: input, shape index: {}]
  %s1 = inlined_call_operand.vmem [shape: f32[3,128,8], index: 1, kind: input, shape index: {}]
  %s2 = inlined_call_operand.vmem [shape: f32[1,8], index: 2, kind: input, shape index: {}]
  %s3 = inlined_call_operand.hbm [shape: f32[8,8], index: 3, kind: output, shape index: {}]
  %s4 = sld [smem:[#allocation0]]
  $region22: #{tpu_custom_call.1} parent=0
    _
  %s6 = ssub.s32 1, %s4
  %s7 = scalar_select 0, %s6, %s4
  $region1: #{tpu_custom_call.1} parent=0
    #allocation2 [shape = 'u8[4096]{0}', space=vmem, size = 0x1000, scoped, tag = 'output window, operand 0, single buffered']
    #allocation3 [shape = 's32[1]{0}', space=sflag, size = 0x4, scoped, tag = 'scoped memory for tpu_custom_call.1']
    %8 = vsyncpa [#allocation3], 0
    // Predicated region
    $region2: #{tpu_custom_call.1} parent=1 // pred_check
      _
    $region3: #{tpu_custom_call.1} parent=1 // pred_check_branch
      %10 = sbr.rel (0) target = $region5
    $region4: #{tpu_custom_call.1} parent=1 // pred_region
      _
    $region5: #{tpu_custom_call.1} parent=1 // pred_fallthru
      _
    // Predicated region
    $region6: #{tpu_custom_call.1} parent=1 // pred_check
      _
    $region7: #{tpu_custom_call.1} parent=1 // pred_check_branch
      %12 = sbr.rel (0) target = $region9
    $region8: #{tpu_custom_call.1} parent=1 // pred_region
      _
    $region9: #{tpu_custom_call.1} parent=1 // pred_fallthru
      _
    // Predicated region
    $region10: #{tpu_custom_call.1} parent=1 // pred_check
      _
    $region11: #{tpu_custom_call.1} parent=1 // pred_check_branch
      %14 = sbr.rel (0) target = $region13
    $region12: #{tpu_custom_call.1} parent=1 // pred_region
      _
    $region13: #{tpu_custom_call.1} parent=1 // pred_fallthru
      _
    %v15 = vld [vmem:[%s0] sm:$0xff]
    %v16 = vld [vmem:[%s1] sm:$0xff]
    %v17 = vld [vmem:[%s1 + $0x8] sm:$0xff]
    %v18 = vld [vmem:[%s1 + $0x10] sm:$0xff]
    %v19 = vld [vmem:[%s1 + $0x18] sm:$0xff]
    %v20 = vld [vmem:[%s1 + $0x20] sm:$0xff]
    %v21 = vld [vmem:[%s1 + $0x28] sm:$0xff]
    %v22 = vld [vmem:[%s1 + $0x30] sm:$0xff]
    %v23 = vld [vmem:[%s1 + $0x38] sm:$0xff]
    %v24 = vld [vmem:[%s1 + $0x40] sm:$0xff]
    %v25 = vld [vmem:[%s1 + $0x48] sm:$0xff]
    %v26 = vld [vmem:[%s1 + $0x50] sm:$0xff]
    %v27 = vld [vmem:[%s1 + $0x58] sm:$0xff]
    %v28 = vld [vmem:[%s1 + $0x60] sm:$0xff]
    %v29 = vld [vmem:[%s1 + $0x68] sm:$0xff]
    %v30 = vld [vmem:[%s1 + $0x70] sm:$0xff]
    %v31 = vld [vmem:[%s1 + $0x78] sm:$0xff]
    %v32 = vmul.f32 %v15, %v15
    %s33 = scalar_lea.vmem %s1, 128
    %v34 = vld [vmem:[%s33] sm:$0xff]
    %v35 = vld [vmem:[%s33 + $0x8] sm:$0xff]
    %v36 = vld [vmem:[%s33 + $0x10] sm:$0xff]
    %v37 = vld [vmem:[%s33 + $0x18] sm:$0xff]
    %v38 = vld [vmem:[%s33 + $0x20] sm:$0xff]
    %v39 = vld [vmem:[%s33 + $0x28] sm:$0xff]
    %v40 = vld [vmem:[%s33 + $0x30] sm:$0xff]
    %v41 = vld [vmem:[%s33 + $0x38] sm:$0xff]
    %v42 = vld [vmem:[%s33 + $0x40] sm:$0xff]
    %v43 = vld [vmem:[%s33 + $0x48] sm:$0xff]
    %v44 = vld [vmem:[%s33 + $0x50] sm:$0xff]
    %v45 = vld [vmem:[%s33 + $0x58] sm:$0xff]
    %v46 = vld [vmem:[%s33 + $0x60] sm:$0xff]
    %v47 = vld [vmem:[%s33 + $0x68] sm:$0xff]
    %v48 = vld [vmem:[%s33 + $0x70] sm:$0xff]
    %v49 = vld [vmem:[%s33 + $0x78] sm:$0xff]
    %50 = vmatprep.subr.mxu0 0.0
    %51 = vmatpush1.msra.mxu0 %v34
    %52 = vmatprep.subr.mxu0 0.0
    %53 = vmatpush1.msra.mxu0 %v35
    %54 = vmatprep.subr.mxu0 0.0
    %55 = vmatpush1.msra.mxu0 %v36
    %56 = vmatprep.subr.mxu0 0.0
    %57 = vmatpush1.msra.mxu0 %v37
    %58 = vmatprep.subr.mxu0 0.0
    %59 = vmatpush1.msra.mxu0 %v38
    %60 = vmatprep.subr.mxu0 0.0
    %61 = vmatpush1.msra.mxu0 %v39
    %62 = vmatprep.subr.mxu0 0.0
    %63 = vmatpush1.msra.mxu0 %v40
    %64 = vmatprep.subr.mxu0 0.0
    %65 = vmatpush1.msra.mxu0 %v41
    %66 = vmatprep.subr.mxu0 0.0
    %67 = vmatpush1.msra.mxu0 %v42
    %68 = vmatprep.subr.mxu0 0.0
    %69 = vmatpush1.msra.mxu0 %v43
    %70 = vmatprep.subr.mxu0 0.0
    %71 = vmatpush1.msra.mxu0 %v44
    %72 = vmatprep.subr.mxu0 0.0
    %73 = vmatpush1.msra.mxu0 %v45
    %74 = vmatprep.subr.mxu0 0.0
    %75 = vmatpush1.msra.mxu0 %v46
    %76 = vmatprep.subr.mxu0 0.0
    %77 = vmatpush1.msra.mxu0 %v47
    %78 = vmatprep.subr.mxu0 0.0
    %79 = vmatpush1.msra.mxu0 %v48
    %80 = vmatprep.subr.mxu0 0.0
    %81 = vmatpush1.msra.mxu0 %v49
    %82 = vmatprep.subr.mxu0 0.0
    %83 = vmatpush1.msra.mxu0 0.0
    %84 = vmatprep.subr.mxu0 0.0
    %85 = vmatpush1.msra.mxu0 0.0
    %86 = vmatprep.subr.mxu0 0.0
    %87 = vmatpush1.msra.mxu0 0.0
    %88 = vmatprep.subr.mxu0 0.0
    %89 = vmatpush1.msra.mxu0 0.0
    %90 = vmatprep.subr.mxu0 0.0
    %91 = vmatpush1.msra.mxu0 0.0
    %92 = vmatprep.subr.mxu0 0.0
    %93 = vmatpush1.msra.mxu0 0.0
    %94 = vmatprep.subr.mxu0 0.0
    %95 = vmatpush1.msra.mxu0 0.0
    %96 = vmatprep.subr.mxu0 0.0
    %97 = vmatpush1.msra.mxu0 0.0
    %98 = vmatprep.subr.mxu0 0.0
    %99 = vmatpush1.msra.mxu0 0.0
    %100 = vmatprep.subr.mxu0 0.0
    %101 = vmatpush1.msra.mxu0 0.0
    %102 = vmatprep.subr.mxu0 0.0
    %103 = vmatpush1.msra.mxu0 0.0
    %104 = vmatprep.subr.mxu0 0.0
    %105 = vmatpush1.msra.mxu0 0.0
    %106 = vmatprep.subr.mxu0 0.0
    %107 = vmatpush1.msra.mxu0 0.0
    %108 = vmatprep.subr.mxu0 0.0
    %109 = vmatpush1.msra.mxu0 0.0
    %110 = vmatprep.subr.mxu0 0.0
    %111 = vmatpush1.msra.mxu0 0.0
    %112 = vmatprep.subr.mxu0 0.0
    %113 = vmatpush1.msra.mxu0 0.0
    %114 = vmatprep.mubr.f32.mxu0 0.0
    %115 = vmatmul.mubr.f32.gmra.mrb[0].mxu0 %v32
    %v116 = vpop.f32.mrb[0].mxu0
    %v117 = vadd.f32 0.0, %v116
    %v118 = vpop.f32.mrb[0].mxu0
    %119 = vdwg.mxu0
    %120 = vmatprep.subr.mxu0 0.0
    %121 = vmatpush1.msra.mxu0 %v16
    %122 = vmatprep.subr.mxu0 0.0
    %123 = vmatpush1.msra.mxu0 %v17
    %124 = vmatprep.subr.mxu0 0.0
    %125 = vmatpush1.msra.mxu0 %v18
    %126 = vmatprep.subr.mxu0 0.0
    %127 = vmatpush1.msra.mxu0 %v19
    %128 = vmatprep.subr.mxu0 0.0
    %129 = vmatpush1.msra.mxu0 %v20
    %130 = vmatprep.subr.mxu0 0.0
    %131 = vmatpush1.msra.mxu0 %v21
    %132 = vmatprep.subr.mxu0 0.0
    %133 = vmatpush1.msra.mxu0 %v22
    %134 = vmatprep.subr.mxu0 0.0
    %135 = vmatpush1.msra.mxu0 %v23
    %136 = vmatprep.subr.mxu0 0.0
    %137 = vmatpush1.msra.mxu0 %v24
    %138 = vmatprep.subr.mxu0 0.0
    %139 = vmatpush1.msra.mxu0 %v25
    %140 = vmatprep.subr.mxu0 0.0
    %141 = vmatpush1.msra.mxu0 %v26
    %142 = vmatprep.subr.mxu0 0.0
    %143 = vmatpush1.msra.mxu0 %v27
    %144 = vmatprep.subr.mxu0 0.0
    %145 = vmatpush1.msra.mxu0 %v28
    %146 = vmatprep.subr.mxu0 0.0
    %147 = vmatpush1.msra.mxu0 %v29
    %148 = vmatprep.subr.mxu0 0.0
    %149 = vmatpush1.msra.mxu0 %v30
    %150 = vmatprep.subr.mxu0 0.0
    %151 = vmatpush1.msra.mxu0 %v31
    %152 = vmatprep.subr.mxu0 0.0
    %153 = vmatpush1.msra.mxu0 0.0
    %154 = vmatprep.subr.mxu0 0.0
    %155 = vmatpush1.msra.mxu0 0.0
    %156 = vmatprep.subr.mxu0 0.0
    %157 = vmatpush1.msra.mxu0 0.0
    %158 = vmatprep.subr.mxu0 0.0
    %159 = vmatpush1.msra.mxu0 0.0
    %160 = vmatprep.subr.mxu0 0.0
    %161 = vmatpush1.msra.mxu0 0.0
    %162 = vmatprep.subr.mxu0 0.0
    %163 = vmatpush1.msra.mxu0 0.0
    %164 = vmatprep.subr.mxu0 0.0
    %165 = vmatpush1.msra.mxu0 0.0
    %166 = vmatprep.subr.mxu0 0.0
    %167 = vmatpush1.msra.mxu0 0.0
    %168 = vmatprep.subr.mxu0 0.0
    %169 = vmatpush1.msra.mxu0 0.0
    %170 = vmatprep.subr.mxu0 0.0
    %171 = vmatpush1.msra.mxu0 0.0
    %172 = vmatprep.subr.mxu0 0.0
    %173 = vmatpush1.msra.mxu0 0.0
    %174 = vmatprep.subr.mxu0 0.0
    %175 = vmatpush1.msra.mxu0 0.0
    %176 = vmatprep.subr.mxu0 0.0
    %177 = vmatpush1.msra.mxu0 0.0
    %178 = vmatprep.subr.mxu0 0.0
    %179 = vmatpush1.msra.mxu0 0.0
    %180 = vmatprep.subr.mxu0 0.0
    %181 = vmatpush1.msra.mxu0 0.0
    %182 = vmatprep.subr.mxu0 0.0
    %183 = vmatpush1.msra.mxu0 0.0
    %184 = vmatprep.mubr.f32.mxu0 0.0
    %185 = vmatmul.mubr.f32.gmra.mrb[0].mxu0 %v15
    %v186 = vpop.f32.mrb[0].mxu0
    %v187 = vadd.f32 %v117, %v186
    %v188 = vpop.f32.mrb[0].mxu0
    %189 = vdwg.mxu0
    %v190 = vmul.f32 %v32, %v15
    %s191 = scalar_lea.vmem %s1, 256
    %v192 = vld [vmem:[%s191] sm:$0xff]
    %v193 = vld [vmem:[%s191 + $0x8] sm:$0xff]
    %v194 = vld [vmem:[%s191 + $0x10] sm:$0xff]
    %v195 = vld [vmem:[%s191 + $0x18] sm:$0xff]
    %v196 = vld [vmem:[%s191 + $0x20] sm:$0xff]
    %v197 = vld [vmem:[%s191 + $0x28] sm:$0xff]
    %v198 = vld [vmem:[%s191 + $0x30] sm:$0xff]
    %v199 = vld [vmem:[%s191 + $0x38] sm:$0xff]
    %v200 = vld [vmem:[%s191 + $0x40] sm:$0xff]
    %v201 = vld [vmem:[%s191 + $0x48] sm:$0xff]
    %v202 = vld [vmem:[%s191 + $0x50] sm:$0xff]
    %v203 = vld [vmem:[%s191 + $0x58] sm:$0xff]
    %v204 = vld [vmem:[%s191 + $0x60] sm:$0xff]
    %v205 = vld [vmem:[%s191 + $0x68] sm:$0xff]
    %v206 = vld [vmem:[%s191 + $0x70] sm:$0xff]
    %v207 = vld [vmem:[%s191 + $0x78] sm:$0xff]
    %208 = vmatprep.subr.mxu0 0.0
    %209 = vmatpush1.msra.mxu0 %v192
    %210 = vmatprep.subr.mxu0 0.0
    %211 = vmatpush1.msra.mxu0 %v193
    %212 = vmatprep.subr.mxu0 0.0
    %213 = vmatpush1.msra.mxu0 %v194
    %214 = vmatprep.subr.mxu0 0.0
    %215 = vmatpush1.msra.mxu0 %v195
    %216 = vmatprep.subr.mxu0 0.0
    %217 = vmatpush1.msra.mxu0 %v196
    %218 = vmatprep.subr.mxu0 0.0
    %219 = vmatpush1.msra.mxu0 %v197
    %220 = vmatprep.subr.mxu0 0.0
    %221 = vmatpush1.msra.mxu0 %v198
    %222 = vmatprep.subr.mxu0 0.0
    %223 = vmatpush1.msra.mxu0 %v199
    %224 = vmatprep.subr.mxu0 0.0
    %225 = vmatpush1.msra.mxu0 %v200
    %226 = vmatprep.subr.mxu0 0.0
    %227 = vmatpush1.msra.mxu0 %v201
    %228 = vmatprep.subr.mxu0 0.0
    %229 = vmatpush1.msra.mxu0 %v202
    %230 = vmatprep.subr.mxu0 0.0
    %231 = vmatpush1.msra.mxu0 %v203
    %232 = vmatprep.subr.mxu0 0.0
    %233 = vmatpush1.msra.mxu0 %v204
    %234 = vmatprep.subr.mxu0 0.0
    %235 = vmatpush1.msra.mxu0 %v205
    %236 = vmatprep.subr.mxu0 0.0
    %237 = vmatpush1.msra.mxu0 %v206
    %238 = vmatprep.subr.mxu0 0.0
    %239 = vmatpush1.msra.mxu0 %v207
    %240 = vmatprep.subr.mxu0 0.0
    %241 = vmatpush1.msra.mxu0 0.0
    %242 = vmatprep.subr.mxu0 0.0
    %243 = vmatpush1.msra.mxu0 0.0
    %244 = vmatprep.subr.mxu0 0.0
    %245 = vmatpush1.msra.mxu0 0.0
    %246 = vmatprep.subr.mxu0 0.0
    %247 = vmatpush1.msra.mxu0 0.0
    %248 = vmatprep.subr.mxu0 0.0
    %249 = vmatpush1.msra.mxu0 0.0
    %250 = vmatprep.subr.mxu0 0.0
    %251 = vmatpush1.msra.mxu0 0.0
    %252 = vmatprep.subr.mxu0 0.0
    %253 = vmatpush1.msra.mxu0 0.0
    %254 = vmatprep.subr.mxu0 0.0
    %255 = vmatpush1.msra.mxu0 0.0
    %256 = vmatprep.subr.mxu0 0.0
    %257 = vmatpush1.msra.mxu0 0.0
    %258 = vmatprep.subr.mxu0 0.0
    %259 = vmatpush1.msra.mxu0 0.0
    %260 = vmatprep.subr.mxu0 0.0
    %261 = vmatpush1.msra.mxu0 0.0
    %262 = vmatprep.subr.mxu0 0.0
    %263 = vmatpush1.msra.mxu0 0.0
    %264 = vmatprep.subr.mxu0 0.0
    %265 = vmatpush1.msra.mxu0 0.0
    %266 = vmatprep.subr.mxu0 0.0
    %267 = vmatpush1.msra.mxu0 0.0
    %268 = vmatprep.subr.mxu0 0.0
    %269 = vmatpush1.msra.mxu0 0.0
    %270 = vmatprep.subr.mxu0 0.0
    %271 = vmatpush1.msra.mxu0 0.0
    %272 = vmatprep.mubr.f32.mxu0 0.0
    %273 = vmatmul.mubr.f32.gmra.mrb[0].mxu0 %v190
    %v274 = vpop.f32.mrb[0].mxu0
    %v275 = vadd.f32 0.0, %v274
    %v276 = vpop.f32.mrb[0].mxu0
    %277 = vdwg.mxu0
    %v278 = vadd.f32 %v187, %v275
    %v279 = vld [vmem:[%s2] sm:$0x1]
    %v281 = vlaneseq
    %v282 = vshrl.u32 %v281, 7
    %v283 = vsub.s32 0, %v282
    %v284 = vrot.slane %v279, %v283
    %v286 = vadd.f32 %v278, %v284
    %vm287 = vcmask 64512
    %288 = vst.msk [vmem:[#allocation2] sm:$0xff] %vm287, %v286
    // Predicated region
    $region14: #{tpu_custom_call.1} parent=1 // pred_check
      _
    $region15: #{tpu_custom_call.1} parent=1 // pred_check_branch
      %290 = sbr.rel (0) target = $region17
    $region16: #{tpu_custom_call.1} parent=1 // pred_region
      %s292 = ssub.s32 128, 128
      %293 = vsyncadd [#allocation3], %s292
      %s295 = sshll.u32 [#allocation2], 4
      %s296 = int_to_ptr.vmem [resolvable:$true] %s295
      %298 = dma.vmem_to_hbm [thread:$0]  %s296, 128, %s3, [#allocation3]
    $region17: #{tpu_custom_call.1} parent=1 // pred_fallthru
      _
    // Predicated region
    $region18: #{tpu_custom_call.1} parent=1 // pred_check
      _
    $region19: #{tpu_custom_call.1} parent=1 // pred_check_branch
      %300 = sbr.rel (0) target = $region21
    $region20: #{tpu_custom_call.1} parent=1 // pred_region
      %301 = dma.done [#allocation3], 128
    $region21: #{tpu_custom_call.1} parent=1 // pred_fallthru
      _
    %302 = vsyncpa [#allocation3], 1

</llo_original>
